<compile_context>
chip_gen: v7x
topology: tpu7x:2x2x1
jax: 0.10.0
libtpu: 0.0.40
codegen_flags: <defaults>
</compile_context>

<pallas_src>
import functools

import jax
import jax.numpy as jnp
from jax.experimental import pallas as pl
from jax.experimental.pallas import tpu as pltpu

_LANE = 128      # lane width: last dims padded to multiples of this
_SUBLANE = 8     # sublane width: batch tiles padded to multiples of this


def _round_up(n: int, m: int) -> int:
    return ((n + m - 1) // m) * m


def _mlp_kernel(x_ref,
                w1_ref, b1_ref,
                w2_ref, b2_ref,
                w3_ref, b3_ref,
                w4_ref, b4_ref,
                out_ref):
    """One batch tile of the 4-layer MLP.

    x_ref: (TILE_B, F_in_pad) bf16 (streamed per grid step)
    w*_ref: bf16, b*_ref: f32 (VMEM-resident, constant index_map)
    out_ref: (TILE_B, F_out_pad) f32
    Dropout is eval-mode => identity.
    """
    x = x_ref[...]                                                    # bf16

    # Layer 1: Linear + ReLU  (bf16 MXU, f32 accumulate, f32 bias/ReLU)
    h = jnp.dot(x, w1_ref[...], preferred_element_type=jnp.float32) + b1_ref[...]
    h = jnp.maximum(h, 0.0).astype(jnp.bfloat16)

    # Layer 2: Linear + ReLU
    h = jnp.dot(h, w2_ref[...], preferred_element_type=jnp.float32) + b2_ref[...]
    h = jnp.maximum(h, 0.0).astype(jnp.bfloat16)

    # Layer 3: Linear + ReLU
    h = jnp.dot(h, w3_ref[...], preferred_element_type=jnp.float32) + b3_ref[...]
    h = jnp.maximum(h, 0.0).astype(jnp.bfloat16)

    # Layer 4: Linear (no activation)
    out = jnp.dot(h, w4_ref[...], preferred_element_type=jnp.float32) + b4_ref[...]
    out_ref[...] = out.astype(out_ref.dtype)


def init_params(key, input_size, hidden_size, output_size):
    """nn.Linear-style init; weights stored (in, out) so the kernel does x @ W."""
    def linear(k, fan_in, fan_out):
        kw, kb = jax.random.split(k)
        bound = 1.0 / jnp.sqrt(fan_in)
        w = jax.random.uniform(kw, (fan_in, fan_out), jnp.float32, -bound, bound)
        b = jax.random.uniform(kb, (1, fan_out), jnp.float32, -bound, bound)
        return w, b

    k1, k2, k3, k4 = jax.random.split(key, 4)
    w1, b1 = linear(k1, input_size, hidden_size)
    w2, b2 = linear(k2, hidden_size, hidden_size)
    w3, b3 = linear(k3, hidden_size, hidden_size)
    w4, b4 = linear(k4, hidden_size, output_size)
    return dict(w1=w1, b1=b1, w2=w2, b2=b2, w3=w3, b3=b3, w4=w4, b4=b4)


def pad_params(params):
    """Zero-pad all feature dims to 128-lane multiples; weights -> bf16, biases -> f32.

    Zero padding is exact: padded input columns are zero, padded weight rows/cols and
    bias entries are zero, so padded activation lanes stay 0 through ReLU/matmuls and
    the valid output columns are bit-identical to the unpadded computation (up to bf16
    rounding of the real operands).
    """
    def pad_w(w):
        fi, fo = w.shape
        return jnp.pad(
            w, ((0, _round_up(fi, _LANE) - fi), (0, _round_up(fo, _LANE) - fo))
        ).astype(jnp.bfloat16)

    def pad_b(b):
        b = b.reshape(1, -1)
        fo = b.shape[1]
        return jnp.pad(b, ((0, 0), (0, _round_up(fo, _LANE) - fo))).astype(jnp.float32)

    return dict(
        w1=pad_w(params["w1"]), b1=pad_b(params["b1"]),
        w2=pad_w(params["w2"]), b2=pad_b(params["b2"]),
        w3=pad_w(params["w3"]), b3=pad_b(params["b3"]),
        w4=pad_w(params["w4"]), b4=pad_b(params["b4"]),
    )


@functools.partial(jax.jit, static_argnames=("out_features", "tile_b"))
def nnbase_forward(base_vec, padded_params, out_features, tile_b=512):
    """JAX/Pallas equivalent of NNbase.forward (eval mode).

    base_vec: (B, ...) -> flattened to (B, F) like torch flatten(start_dim=1).
    padded_params: output of pad_params().
    """
    B = base_vec.shape[0]
    x = base_vec.reshape(B, -1).astype(jnp.float32)
    f_in = x.shape[1]

    p = padded_params
    f_in_pad, h_pad = p["w1"].shape
    f_out_pad = p["w4"].shape[1]

    # Batch tile: as large as reasonable (up to tile_b), sublane-aligned.
    tile_rows = min(tile_b, _round_up(B, _SUBLANE))
    b_pad = _round_up(B, tile_rows)
    num_tiles = b_pad // tile_rows

    # Pad batch + input features with zeros; bf16 operands for the MXU.
    x = jnp.pad(x, ((0, b_pad - B), (0, f_in_pad - f_in))).astype(jnp.bfloat16)

    # Streamed specs (per batch tile) vs resident specs (weights/biases).
    x_spec = pl.BlockSpec((tile_rows, f_in_pad), lambda i: (i, 0))
    out_spec = pl.BlockSpec((tile_rows, f_out_pad), lambda i: (i, 0))
    resident = lambda shape: pl.BlockSpec(shape, lambda i: (0,) * len(shape))

    flops = 2 * b_pad * (f_in_pad * h_pad + 2 * h_pad * h_pad + h_pad * f_out_pad)
    bytes_accessed = (
        x.size * 2
        + sum(int(p[k].size) * 2 for k in ("w1", "w2", "w3", "w4"))
        + sum(int(p[k].size) * 4 for k in ("b1", "b2", "b3", "b4"))
        + b_pad * f_out_pad * 4
    )

    out_padded = pl.pallas_call(
        _mlp_kernel,
        out_shape=jax.ShapeDtypeStruct((b_pad, f_out_pad), jnp.float32),
        grid=(num_tiles,),
        in_specs=[
            x_spec,
            resident(p["w1"].shape), resident(p["b1"].shape),
            resident(p["w2"].shape), resident(p["b2"].shape),
            resident(p["w3"].shape), resident(p["b3"].shape),
            resident(p["w4"].shape), resident(p["b4"].shape),
        ],
        out_specs=out_spec,
        compiler_params=pltpu.CompilerParams(
            dimension_semantics=("parallel",),
        ),
        cost_estimate=pl.CostEstimate(
            flops=flops, transcendentals=0, bytes_accessed=bytes_accessed),
    )(x,
      p["w1"], p["b1"], p["w2"], p["b2"],
      p["w3"], p["b3"], p["w4"], p["b4"])

    return out_padded[:B, :out_features]


def _reference_forward_f32(base_vec, p):
    x = base_vec.reshape(base_vec.shape[0], -1).astype(jnp.float32)
    h = jnp.maximum(x @ p["w1"] + p["b1"], 0.0)
    h = jnp.maximum(h @ p["w2"] + p["b2"], 0.0)
    h = jnp.maximum(h @ p["w3"] + p["b3"], 0.0)
    return h @ p["w4"] + p["b4"]


def _reference_forward_bf16(base_vec, p):
    """Mirrors the kernel numerics: bf16 matmul operands, f32 accumulate/bias/ReLU."""
    bf = jnp.bfloat16
    dot = lambda a, w: jnp.dot(a.astype(bf), w.astype(bf),
                               preferred_element_type=jnp.float32)
    x = base_vec.reshape(base_vec.shape[0], -1).astype(jnp.float32)
    h = jnp.maximum(dot(x, p["w1"]) + p["b1"], 0.0)
    h = jnp.maximum(dot(h, p["w2"]) + p["b2"], 0.0)
    h = jnp.maximum(dot(h, p["w3"]) + p["b3"], 0.0)
    return dot(h, p["w4"]) + p["b4"]


if __name__ == "__main__":
    key = jax.random.PRNGKey(0)
    k_param, k_input = jax.random.split(key)

    batch = 8
    input_size = 32          # a (batch, 4, 8) tensor flattened to 32 features
    hidden_size = 32
    output_size = 16

    params = init_params(k_param, input_size, hidden_size, output_size)
    padded_params = pad_params(params)

    base_vec = jax.random.normal(k_input, (batch, 4, 8), jnp.float32)

    out = nnbase_forward(base_vec, padded_params, output_size)
    out = jax.block_until_ready(out)

    assert out.shape == (batch, output_size)
    assert not bool(jnp.any(jnp.isnan(out)))

    # Tight check against a reference that mirrors the kernel's bf16/f32 numerics.
    ref_bf16 = _reference_forward_bf16(base_vec, params)
    assert jnp.allclose(out, ref_bf16, atol=2e-3, rtol=2e-3), (
        float(jnp.max(jnp.abs(out - ref_bf16))))

    # Looser sanity check against the pure-f32 reference (bf16 rounding slack).
    ref_f32 = _reference_forward_f32(base_vec, params)
    assert jnp.allclose(out, ref_f32, atol=1e-1, rtol=1e-1), (
        float(jnp.max(jnp.abs(out - ref_f32))))

    print("KERNEL_OK")
</pallas_src>

<mosaic_0001>
module attributes {stable_mosaic.version = 11 : i64} {
  func.func @_mlp_kernel(%arg0: i32, %arg1: memref<8x128xbf16, #tpu.memory_space<vmem>>, %arg2: memref<128x128xbf16, #tpu.memory_space<vmem>>, %arg3: memref<1x128xf32, #tpu.memory_space<vmem>>, %arg4: memref<128x128xbf16, #tpu.memory_space<vmem>>, %arg5: memref<1x128xf32, #tpu.memory_space<vmem>>, %arg6: memref<128x128xbf16, #tpu.memory_space<vmem>>, %arg7: memref<1x128xf32, #tpu.memory_space<vmem>>, %arg8: memref<128x128xbf16, #tpu.memory_space<vmem>>, %arg9: memref<1x128xf32, #tpu.memory_space<vmem>>, %arg10: memref<8x128xf32, #tpu.memory_space<vmem>>) attributes {dimension_semantics = [#tpu.dimension_semantics<parallel>], iteration_bounds = array<i64: 1>, scalar_prefetch = 0 : i64, scratch_operands = 0 : i64, tpu.core_type = #tpu.core_type<tc>, window_params = [{transform_indices = @transform_0, window_bounds = array<i64: 8, 128>}, {pipeline_mode = #tpu.pipeline_mode<synchronous>, transform_indices = @transform_1, window_bounds = array<i64: 128, 128>}, {pipeline_mode = #tpu.pipeline_mode<synchronous>, transform_indices = @transform_2, window_bounds = array<i64: 1, 128>}, {pipeline_mode = #tpu.pipeline_mode<synchronous>, transform_indices = @transform_3, window_bounds = array<i64: 128, 128>}, {pipeline_mode = #tpu.pipeline_mode<synchronous>, transform_indices = @transform_4, window_bounds = array<i64: 1, 128>}, {pipeline_mode = #tpu.pipeline_mode<synchronous>, transform_indices = @transform_5, window_bounds = array<i64: 128, 128>}, {pipeline_mode = #tpu.pipeline_mode<synchronous>, transform_indices = @transform_6, window_bounds = array<i64: 1, 128>}, {pipeline_mode = #tpu.pipeline_mode<synchronous>, transform_indices = @transform_7, window_bounds = array<i64: 128, 128>}, {pipeline_mode = #tpu.pipeline_mode<synchronous>, transform_indices = @transform_8, window_bounds = array<i64: 1, 128>}, {transform_indices = @transform_9, window_bounds = array<i64: 8, 128>}]} {
    %c0 = arith.constant 0 : index
    %c0_0 = arith.constant 0 : index
    %0 = vector.load %arg1[%c0, %c0_0] : memref<8x128xbf16, #tpu.memory_space<vmem>>, vector<8x128xbf16>
    %c0_1 = arith.constant 0 : index
    %c0_2 = arith.constant 0 : index
    %1 = vector.load %arg2[%c0_1, %c0_2] : memref<128x128xbf16, #tpu.memory_space<vmem>>, vector<128x128xbf16>
    %cst = arith.constant dense<0.000000e+00> : vector<8x128xf32>
    %2 = tpu.matmul %0, %1, %cst {dimension_numbers = #tpu.dot_dimension_numbers<[1], [0], [0], [1], [0, 0, 1, 1], [], []>} : vector<8x128xbf16>, vector<128x128xbf16>, vector<8x128xf32> -> vector<8x128xf32>
    %c0_3 = arith.constant 0 : index
    %c0_4 = arith.constant 0 : index
    %3 = vector.load %arg3[%c0_3, %c0_4] : memref<1x128xf32, #tpu.memory_space<vmem>>, vector<1x128xf32>
    %4 = vector.broadcast %3 : vector<1x128xf32> to vector<8x128xf32>
    %5 = arith.addf %2, %4 : vector<8x128xf32>
    %cst_5 = arith.constant 0.000000e+00 : f32
    %6 = vector.broadcast %cst_5 : f32 to vector<8x128xf32>
    %7 = arith.maximumf %5, %6 : vector<8x128xf32>
    %8 = arith.truncf %7 : vector<8x128xf32> to vector<8x128xbf16>
    %c0_6 = arith.constant 0 : index
    %c0_7 = arith.constant 0 : index
    %9 = vector.load %arg4[%c0_6, %c0_7] : memref<128x128xbf16, #tpu.memory_space<vmem>>, vector<128x128xbf16>
    %cst_8 = arith.constant dense<0.000000e+00> : vector<8x128xf32>
    %10 = tpu.matmul %8, %9, %cst_8 {dimension_numbers = #tpu.dot_dimension_numbers<[1], [0], [0], [1], [0, 0, 1, 1], [], []>} : vector<8x128xbf16>, vector<128x128xbf16>, vector<8x128xf32> -> vector<8x128xf32>
    %c0_9 = arith.constant 0 : index
    %c0_10 = arith.constant 0 : index
    %11 = vector.load %arg5[%c0_9, %c0_10] : memref<1x128xf32, #tpu.memory_space<vmem>>, vector<1x128xf32>
    %12 = vector.broadcast %11 : vector<1x128xf32> to vector<8x128xf32>
    %13 = arith.addf %10, %12 : vector<8x128xf32>
    %cst_11 = arith.constant 0.000000e+00 : f32
    %14 = vector.broadcast %cst_11 : f32 to vector<8x128xf32>
    %15 = arith.maximumf %13, %14 : vector<8x128xf32>
    %16 = arith.truncf %15 : vector<8x128xf32> to vector<8x128xbf16>
    %c0_12 = arith.constant 0 : index
    %c0_13 = arith.constant 0 : index
    %17 = vector.load %arg6[%c0_12, %c0_13] : memref<128x128xbf16, #tpu.memory_space<vmem>>, vector<128x128xbf16>
    %cst_14 = arith.constant dense<0.000000e+00> : vector<8x128xf32>
    %18 = tpu.matmul %16, %17, %cst_14 {dimension_numbers = #tpu.dot_dimension_numbers<[1], [0], [0], [1], [0, 0, 1, 1], [], []>} : vector<8x128xbf16>, vector<128x128xbf16>, vector<8x128xf32> -> vector<8x128xf32>
    %c0_15 = arith.constant 0 : index
    %c0_16 = arith.constant 0 : index
    %19 = vector.load %arg7[%c0_15, %c0_16] : memref<1x128xf32, #tpu.memory_space<vmem>>, vector<1x128xf32>
    %20 = vector.broadcast %19 : vector<1x128xf32> to vector<8x128xf32>
    %21 = arith.addf %18, %20 : vector<8x128xf32>
    %cst_17 = arith.constant 0.000000e+00 : f32
    %22 = vector.broadcast %cst_17 : f32 to vector<8x128xf32>
    %23 = arith.maximumf %21, %22 : vector<8x128xf32>
    %24 = arith.truncf %23 : vector<8x128xf32> to vector<8x128xbf16>
    %c0_18 = arith.constant 0 : index
    %c0_19 = arith.constant 0 : index
    %25 = vector.load %arg8[%c0_18, %c0_19] : memref<128x128xbf16, #tpu.memory_space<vmem>>, vector<128x128xbf16>
    %cst_20 = arith.constant dense<0.000000e+00> : vector<8x128xf32>
    %26 = tpu.matmul %24, %25, %cst_20 {dimension_numbers = #tpu.dot_dimension_numbers<[1], [0], [0], [1], [0, 0, 1, 1], [], []>} : vector<8x128xbf16>, vector<128x128xbf16>, vector<8x128xf32> -> vector<8x128xf32>
    %c0_21 = arith.constant 0 : index
    %c0_22 = arith.constant 0 : index
    %27 = vector.load %arg9[%c0_21, %c0_22] : memref<1x128xf32, #tpu.memory_space<vmem>>, vector<1x128xf32>
    %28 = vector.broadcast %27 : vector<1x128xf32> to vector<8x128xf32>
    %29 = arith.addf %26, %28 : vector<8x128xf32>
    %c0_23 = arith.constant 0 : index
    %c0_24 = arith.constant 0 : index
    %30 = vector.load %arg10[%c0_23, %c0_24] : memref<8x128xf32, #tpu.memory_space<vmem>>, vector<8x128xf32>
    tpu.vector_store %arg10[%c0_23, %c0_24], %29 {strides = array<i32>} : memref<8x128xf32, #tpu.memory_space<vmem>>, vector<8x128xf32>,
    return
  }
  func.func @transform_0(%arg0: i32) -> (i32, i32) {
    %c0_i32 = arith.constant 0 : i32
    %c0_i32_0 = arith.constant 0 : i32
    return %arg0, %c0_i32 : i32, i32
  }
  func.func @transform_1(%arg0: i32) -> (i32, i32) {
    %c0_i32 = arith.constant 0 : i32
    %c0_i32_0 = arith.constant 0 : i32
    %c0_i32_1 = arith.constant 0 : i32
    return %c0_i32, %c0_i32_0 : i32, i32
  }
  func.func @transform_2(%arg0: i32) -> (i32, i32) {
    %c0_i32 = arith.constant 0 : i32
    %c0_i32_0 = arith.constant 0 : i32
    %c0_i32_1 = arith.constant 0 : i32
    return %c0_i32, %c0_i32_0 : i32, i32
  }
  func.func @transform_3(%arg0: i32) -> (i32, i32) {
    %c0_i32 = arith.constant 0 : i32
    %c0_i32_0 = arith.constant 0 : i32
    %c0_i32_1 = arith.constant 0 : i32
    return %c0_i32, %c0_i32_0 : i32, i32
  }
  func.func @transform_4(%arg0: i32) -> (i32, i32) {
    %c0_i32 = arith.constant 0 : i32
    %c0_i32_0 = arith.constant 0 : i32
    %c0_i32_1 = arith.constant 0 : i32
    return %c0_i32, %c0_i32_0 : i32, i32
  }
  func.func @transform_5(%arg0: i32) -> (i32, i32) {
    %c0_i32 = arith.constant 0 : i32
    %c0_i32_0 = arith.constant 0 : i32
    %c0_i32_1 = arith.constant 0 : i32
    return %c0_i32, %c0_i32_0 : i32, i32
  }
  func.func @transform_6(%arg0: i32) -> (i32, i32) {
    %c0_i32 = arith.constant 0 : i32
    %c0_i32_0 = arith.constant 0 : i32
    %c0_i32_1 = arith.constant 0 : i32
    return %c0_i32, %c0_i32_0 : i32, i32
  }
  func.func @transform_7(%arg0: i32) -> (i32, i32) {
    %c0_i32 = arith.constant 0 : i32
    %c0_i32_0 = arith.constant 0 : i32
    %c0_i32_1 = arith.constant 0 : i32
    return %c0_i32, %c0_i32_0 : i32, i32
  }
  func.func @transform_8(%arg0: i32) -> (i32, i32) {
    %c0_i32 = arith.constant 0 : i32
    %c0_i32_0 = arith.constant 0 : i32
    %c0_i32_1 = arith.constant 0 : i32
    return %c0_i32, %c0_i32_0 : i32, i32
  }
  func.func @transform_9(%arg0: i32) -> (i32, i32) {
    %c0_i32 = arith.constant 0 : i32
    %c0_i32_0 = arith.constant 0 : i32
    return %arg0, %c0_i32 : i32, i32
  }
}

</mosaic_0001>

<llo_original>
// kernel: nnbase_forward.1
$region0: #{nnbase_forward.1}
  #allocation0 [shape = 'u32[]', space=smem, size = 0x4, offset = 0x4, fixed_abs, tag = 'smem constant byte address 0x4 - core index']
  #allocation1 [shape = 'u32[144,128]{1,0:T(1,128)}', space=vmem, size = 0x12000, scoped, tag = 'internal scratch']
  %s0 = inlined_call_operand.vmem [shape: bf16[8,128], index: 0, kind: input, shape index: {}]
  %s1 = inlined_call_operand.vmem [shape: bf16[128,128], index: 1, kind: input, shape index: {}]
  %s2 = inlined_call_operand.vmem [shape: f32[1,128], index: 2, kind: input, shape index: {}]
  %s3 = inlined_call_operand.hbm [shape: bf16[128,128], index: 3, kind: input, shape index: {}]
  %s4 = inlined_call_operand.vmem [shape: f32[1,128], index: 4, kind: input, shape index: {}]
  %s5 = inlined_call_operand.hbm [shape: bf16[128,128], index: 5, kind: input, shape index: {}]
  %s6 = inlined_call_operand.vmem [shape: f32[1,128], index: 6, kind: input, shape index: {}]
  %s7 = inlined_call_operand.hbm [shape: bf16[128,128], index: 7, kind: input, shape index: {}]
  %s8 = inlined_call_operand.vmem [shape: f32[1,128], index: 8, kind: input, shape index: {}]
  %s9 = inlined_call_operand.hbm [shape: f32[8,128], index: 9, kind: output, shape index: {}]
  %s10 = sld [smem:[#allocation0]]
  $region58: #{nnbase_forward.1} parent=0
    _
  %s12 = ssub.s32 1, %s10
  %s13 = scalar_select 0, %s12, %s10
  $region1: #{nnbase_forward.1} parent=0
    #allocation2 [shape = 'u8[32768]{0}', space=vmem, size = 0x8000, scoped, tag = 'input window, operand 3, single buffered']
    #allocation3 [shape = 's32[1]{0}', space=sflag, size = 0x4, scoped, tag = 'scoped memory for nnbase_forward.1']
    #allocation4 [shape = 's32[1]{0}', space=sflag, size = 0x4, scoped, tag = 'scoped memory for nnbase_forward.1']
    #allocation5 [shape = 'u8[32768]{0}', space=vmem, size = 0x8000, scoped, tag = 'input window, operand 5, single buffered']
    #allocation6 [shape = 's32[1]{0}', space=sflag, size = 0x4, scoped, tag = 'scoped memory for nnbase_forward.1']
    #allocation7 [shape = 'u8[32768]{0}', space=vmem, size = 0x8000, scoped, tag = 'input window, operand 7, single buffered']
    #allocation8 [shape = 'u8[4096]{0}', space=vmem, size = 0x1000, scoped, tag = 'output window, operand 0, single buffered']
    %14 = vsyncpa [#allocation3], 0
    %15 = vsyncpa [#allocation6], 0
    %16 = vsyncpa [#allocation4], 0
    // Predicated region
    $region2: #{nnbase_forward.1} parent=1 // pred_check
      _
    $region3: #{nnbase_forward.1} parent=1 // pred_check_branch
      %18 = sbr.rel (0) target = $region5
    $region4: #{nnbase_forward.1} parent=1 // pred_region
      _
    $region5: #{nnbase_forward.1} parent=1 // pred_fallthru
      _
    // Predicated region
    $region6: #{nnbase_forward.1} parent=1 // pred_check
      _
    $region7: #{nnbase_forward.1} parent=1 // pred_check_branch
      %20 = sbr.rel (0) target = $region9
    $region8: #{nnbase_forward.1} parent=1 // pred_region
      _
    $region9: #{nnbase_forward.1} parent=1 // pred_fallthru
      _
    // Predicated region
    $region10: #{nnbase_forward.1} parent=1 // pred_check
      _
    $region11: #{nnbase_forward.1} parent=1 // pred_check_branch
      %22 = sbr.rel (0) target = $region13
    $region12: #{nnbase_forward.1} parent=1 // pred_region
      _
    $region13: #{nnbase_forward.1} parent=1 // pred_fallthru
      _
    // Predicated region
    $region14: #{nnbase_forward.1} parent=1 // pred_check
      _
    $region15: #{nnbase_forward.1} parent=1 // pred_check_branch
      %24 = sbr.rel (0) target = $region17
    $region16: #{nnbase_forward.1} parent=1 // pred_region
      %s26 = ssub.s32 1024, 1024
      %27 = vsyncadd [#allocation3], %s26
      %s28 = sshll.u32 [#allocation2], 4
      %s29 = int_to_ptr.vmem [resolvable:$true] %s28
      %34 = dma.hbm_to_vmem [thread:$0]  %s3, 1024, %s29, [#allocation3], 64, 64, 4
    $region17: #{nnbase_forward.1} parent=1 // pred_fallthru
      _
    // Predicated region
    $region18: #{nnbase_forward.1} parent=1 // pred_check
      _
    $region19: #{nnbase_forward.1} parent=1 // pred_check_branch
      %36 = sbr.rel (0) target = $region21
    $region20: #{nnbase_forward.1} parent=1 // pred_region
      _
    $region21: #{nnbase_forward.1} parent=1 // pred_fallthru
      _
    // Predicated region
    $region22: #{nnbase_forward.1} parent=1 // pred_check
      _
    $region23: #{nnbase_forward.1} parent=1 // pred_check_branch
      %38 = sbr.rel (0) target = $region25
    $region24: #{nnbase_forward.1} parent=1 // pred_region
      %s40 = ssub.s32 1024, 1024
      %41 = vsyncadd [#allocation6], %s40
      %s42 = sshll.u32 [#allocation5], 4
      %s43 = int_to_ptr.vmem [resolvable:$true] %s42
      %48 = dma.hbm_to_vmem [thread:$0]  %s5, 1024, %s43, [#allocation6], 64, 64, 4
    $region25: #{nnbase_forward.1} parent=1 // pred_fallthru
      _
    // Predicated region
    $region26: #{nnbase_forward.1} parent=1 // pred_check
      _
    $region27: #{nnbase_forward.1} parent=1 // pred_check_branch
      %50 = sbr.rel (0) target = $region29
    $region28: #{nnbase_forward.1} parent=1 // pred_region
      _
    $region29: #{nnbase_forward.1} parent=1 // pred_fallthru
      _
    // Predicated region
    $region30: #{nnbase_forward.1} parent=1 // pred_check
      _
    $region31: #{nnbase_forward.1} parent=1 // pred_check_branch
      %52 = sbr.rel (0) target = $region33
    $region32: #{nnbase_forward.1} parent=1 // pred_region
      %s54 = ssub.s32 1024, 1024
      %55 = vsyncadd [#allocation6], %s54
      %s56 = sshll.u32 [#allocation7], 4
      %s57 = int_to_ptr.vmem [resolvable:$true] %s56
      %62 = dma.hbm_to_vmem [thread:$0]  %s7, 1024, %s57, [#allocation6], 64, 64, 4
    $region33: #{nnbase_forward.1} parent=1 // pred_fallthru
      _
    // Predicated region
    $region34: #{nnbase_forward.1} parent=1 // pred_check
      _
    $region35: #{nnbase_forward.1} parent=1 // pred_check_branch
      %64 = sbr.rel (0) target = $region37
    $region36: #{nnbase_forward.1} parent=1 // pred_region
      _
    $region37: #{nnbase_forward.1} parent=1 // pred_fallthru
      _
    // Predicated region
    $region38: #{nnbase_forward.1} parent=1 // pred_check
      _
    $region39: #{nnbase_forward.1} parent=1 // pred_check_branch
      %66 = sbr.rel (0) target = $region41
    $region40: #{nnbase_forward.1} parent=1 // pred_region
      %67 = dma.done [#allocation3], 1024
    $region41: #{nnbase_forward.1} parent=1 // pred_fallthru
      _
    // Predicated region
    $region42: #{nnbase_forward.1} parent=1 // pred_check
      _
    $region43: #{nnbase_forward.1} parent=1 // pred_check_branch
      %69 = sbr.rel (0) target = $region45
    $region44: #{nnbase_forward.1} parent=1 // pred_region
      %70 = dma.done [#allocation6], 1024
    $region45: #{nnbase_forward.1} parent=1 // pred_fallthru
      _
    // Predicated region
    $region46: #{nnbase_forward.1} parent=1 // pred_check
      _
    $region47: #{nnbase_forward.1} parent=1 // pred_check_branch
      %72 = sbr.rel (0) target = $region49
    $region48: #{nnbase_forward.1} parent=1 // pred_region
      %73 = dma.done [#allocation6], 1024
    $region49: #{nnbase_forward.1} parent=1 // pred_fallthru
      _
    %v75 = vld [vmem:[%s0] sm:$0xf]
    %v76 = vld [vmem:[%s1] sm:$0xf]
    %v77 = vld [vmem:[%s1 + $0x4] sm:$0xf]
    %v78 = vld [vmem:[%s1 + $0x8] sm:$0xf]
    %v79 = vld [vmem:[%s1 + $0xc] sm:$0xf]
    %v80 = vld [vmem:[%s1 + $0x10] sm:$0xf]
    %v81 = vld [vmem:[%s1 + $0x14] sm:$0xf]
    %v82 = vld [vmem:[%s1 + $0x18] sm:$0xf]
    %v83 = vld [vmem:[%s1 + $0x1c] sm:$0xf]
    %v84 = vld [vmem:[%s1 + $0x20] sm:$0xf]
    %v85 = vld [vmem:[%s1 + $0x24] sm:$0xf]
    %v86 = vld [vmem:[%s1 + $0x28] sm:$0xf]
    %v87 = vld [vmem:[%s1 + $0x2c] sm:$0xf]
    %v88 = vld [vmem:[%s1 + $0x30] sm:$0xf]
    %v89 = vld [vmem:[%s1 + $0x34] sm:$0xf]
    %v90 = vld [vmem:[%s1 + $0x38] sm:$0xf]
    %v91 = vld [vmem:[%s1 + $0x3c] sm:$0xf]
    %v92 = vld [vmem:[%s2] sm:$0x1]
    %v94 = vlaneseq
    %v95 = vshrl.u32 %v94, 7
    %v96 = vsub.s32 0, %v95
    %v97 = vrot.slane %v92, %v96
    %v115 = vunpack.c.l.b16 %v76
    %v116 = vunpack.c.l.b16 %v77
    %v117 = vunpack.c.l.b16 %v78
    %v118 = vunpack.c.l.b16 %v79
    %v119 = vunpack.c.l.b16 %v80
    %v120 = vunpack.c.l.b16 %v81
    %v121 = vunpack.c.l.b16 %v82
    %v122 = vunpack.c.l.b16 %v83
    %v123 = vunpack.c.l.b16 %v84
    %v124 = vunpack.c.l.b16 %v85
    %v125 = vunpack.c.l.b16 %v86
    %v126 = vunpack.c.l.b16 %v87
    %v127 = vunpack.c.l.b16 %v88
    %v128 = vunpack.c.l.b16 %v89
    %v129 = vunpack.c.l.b16 %v90
    %v130 = vunpack.c.l.b16 %v91
    %v131 = vpack.c.b16 %v116, %v115
    %v132 = vpack.c.b16 %v118, %v117
    %v133 = vpack.c.b16 %v120, %v119
    %v134 = vpack.c.b16 %v122, %v121
    %v135 = vpack.c.b16 %v124, %v123
    %v136 = vpack.c.b16 %v126, %v125
    %v137 = vpack.c.b16 %v128, %v127
    %v138 = vpack.c.b16 %v130, %v129
    %147 = vmatprep.subr.bf16.mxu0 0
    %148 = vmatpush1.bf16.msra.mxu0 %v131
    %149 = vmatprep.subr.bf16.mxu0 0
    %150 = vmatpush1.bf16.msra.mxu0 %v132
    %151 = vmatprep.subr.bf16.mxu0 0
    %152 = vmatpush1.bf16.msra.mxu0 %v133
    %153 = vmatprep.subr.bf16.mxu0 0
    %154 = vmatpush1.bf16.msra.mxu0 %v134
    %155 = vmatprep.subr.bf16.mxu0 0
    %156 = vmatpush1.bf16.msra.mxu0 %v135
    %157 = vmatprep.subr.bf16.mxu0 0
    %158 = vmatpush1.bf16.msra.mxu0 %v136
    %159 = vmatprep.subr.bf16.mxu0 0
    %160 = vmatpush1.bf16.msra.mxu0 %v137
    %161 = vmatprep.subr.bf16.mxu0 0
    %162 = vmatpush1.bf16.msra.mxu0 %v138
    %163 = vmatprep.subr.bf16.mxu0 0
    %164 = vmatpush1.bf16.msra.mxu0 0
    %165 = vmatprep.subr.bf16.mxu0 0
    %166 = vmatpush1.bf16.msra.mxu0 0
    %167 = vmatprep.subr.bf16.mxu0 0
    %168 = vmatpush1.bf16.msra.mxu0 0
    %169 = vmatprep.subr.bf16.mxu0 0
    %170 = vmatpush1.bf16.msra.mxu0 0
    %171 = vmatprep.subr.bf16.mxu0 0
    %172 = vmatpush1.bf16.msra.mxu0 0
    %173 = vmatprep.subr.bf16.mxu0 0
    %174 = vmatpush1.bf16.msra.mxu0 0
    %175 = vmatprep.subr.bf16.mxu0 0
    %176 = vmatpush1.bf16.msra.mxu0 0
    %177 = vmatprep.subr.bf16.mxu0 0
    %178 = vmatpush1.bf16.msra.mxu0 0
    %179 = vmatprep.mubr.bf16.mxu0 0
    %180 = vmatmul.mubr.bf16.gmra.mrb[0].mxu0 %v75
    %v181 = vpop.f32.mrb[0].mxu0
    %v182 = vadd.f32 %v97, %v181
    %v183 = vpop.f32.mrb[0].mxu0
    %v184 = vpop.f32.mrb[0].mxu0
    %v185 = vpop.f32.mrb[0].mxu0
    %186 = vdwg.mxu0
    %v187 = vmax.f32 %v182, 0.0
    %v188 = vpack.c.bf16 %v187, %v187
    %v189 = vld [vmem:[#allocation2] sm:$0xf]
    %v190 = vld [vmem:[#allocation2 + $0x4] sm:$0xf]
    %v191 = vld [vmem:[#allocation2 + $0x8] sm:$0xf]
    %v192 = vld [vmem:[#allocation2 + $0xc] sm:$0xf]
    %v193 = vld [vmem:[#allocation2 + $0x10] sm:$0xf]
    %v194 = vld [vmem:[#allocation2 + $0x14] sm:$0xf]
    %v195 = vld [vmem:[#allocation2 + $0x18] sm:$0xf]
    %v196 = vld [vmem:[#allocation2 + $0x1c] sm:$0xf]
    %v197 = vld [vmem:[#allocation2 + $0x20] sm:$0xf]
    %v198 = vld [vmem:[#allocation2 + $0x24] sm:$0xf]
    %v199 = vld [vmem:[#allocation2 + $0x28] sm:$0xf]
    %v200 = vld [vmem:[#allocation2 + $0x2c] sm:$0xf]
    %v201 = vld [vmem:[#allocation2 + $0x30] sm:$0xf]
    %v202 = vld [vmem:[#allocation2 + $0x34] sm:$0xf]
    %v203 = vld [vmem:[#allocation2 + $0x38] sm:$0xf]
    %v204 = vld [vmem:[#allocation2 + $0x3c] sm:$0xf]
    %v205 = vld [vmem:[%s4] sm:$0x1]
    %v207 = vlaneseq
    %v208 = vshrl.u32 %v207, 7
    %v209 = vsub.s32 0, %v208
    %v210 = vrot.slane %v205, %v209
    %v228 = vunpack.c.l.b16 %v189
    %v229 = vunpack.c.l.b16 %v190
    %v230 = vunpack.c.l.b16 %v191
    %v231 = vunpack.c.l.b16 %v192
    %v232 = vunpack.c.l.b16 %v193
    %v233 = vunpack.c.l.b16 %v194
    %v234 = vunpack.c.l.b16 %v195
    %v235 = vunpack.c.l.b16 %v196
    %v236 = vunpack.c.l.b16 %v197
    %v237 = vunpack.c.l.b16 %v198
    %v238 = vunpack.c.l.b16 %v199
    %v239 = vunpack.c.l.b16 %v200
    %v240 = vunpack.c.l.b16 %v201
    %v241 = vunpack.c.l.b16 %v202
    %v242 = vunpack.c.l.b16 %v203
    %v243 = vunpack.c.l.b16 %v204
    %v244 = vpack.c.b16 %v229, %v228
    %v245 = vpack.c.b16 %v231, %v230
    %v246 = vpack.c.b16 %v233, %v232
    %v247 = vpack.c.b16 %v235, %v234
    %v248 = vpack.c.b16 %v237, %v236
    %v249 = vpack.c.b16 %v239, %v238
    %v250 = vpack.c.b16 %v241, %v240
    %v251 = vpack.c.b16 %v243, %v242
    %260 = vmatprep.subr.bf16.mxu0 0
    %261 = vmatpush1.bf16.msra.mxu0 %v244
    %262 = vmatprep.subr.bf16.mxu0 0
    %263 = vmatpush1.bf16.msra.mxu0 %v245
    %264 = vmatprep.subr.bf16.mxu0 0
    %265 = vmatpush1.bf16.msra.mxu0 %v246
    %266 = vmatprep.subr.bf16.mxu0 0
    %267 = vmatpush1.bf16.msra.mxu0 %v247
    %268 = vmatprep.subr.bf16.mxu0 0
    %269 = vmatpush1.bf16.msra.mxu0 %v248
    %270 = vmatprep.subr.bf16.mxu0 0
    %271 = vmatpush1.bf16.msra.mxu0 %v249
    %272 = vmatprep.subr.bf16.mxu0 0
    %273 = vmatpush1.bf16.msra.mxu0 %v250
    %274 = vmatprep.subr.bf16.mxu0 0
    %275 = vmatpush1.bf16.msra.mxu0 %v251
    %276 = vmatprep.subr.bf16.mxu0 0
    %277 = vmatpush1.bf16.msra.mxu0 0
    %278 = vmatprep.subr.bf16.mxu0 0
    %279 = vmatpush1.bf16.msra.mxu0 0
    %280 = vmatprep.subr.bf16.mxu0 0
    %281 = vmatpush1.bf16.msra.mxu0 0
    %282 = vmatprep.subr.bf16.mxu0 0
    %283 = vmatpush1.bf16.msra.mxu0 0
    %284 = vmatprep.subr.bf16.mxu0 0
    %285 = vmatpush1.bf16.msra.mxu0 0
    %286 = vmatprep.subr.bf16.mxu0 0
    %287 = vmatpush1.bf16.msra.mxu0 0
    %288 = vmatprep.subr.bf16.mxu0 0
    %289 = vmatpush1.bf16.msra.mxu0 0
    %290 = vmatprep.subr.bf16.mxu0 0
    %291 = vmatpush1.bf16.msra.mxu0 0
    %292 = vmatprep.mubr.bf16.mxu0 0
    %293 = vmatmul.mubr.bf16.gmra.mrb[0].mxu0 %v188
    %v294 = vpop.f32.mrb[0].mxu0
    %v295 = vadd.f32 %v210, %v294
    %v296 = vpop.f32.mrb[0].mxu0
    %v297 = vpop.f32.mrb[0].mxu0
    %v298 = vpop.f32.mrb[0].mxu0
    %299 = vdwg.mxu0
    %v300 = vmax.f32 %v295, 0.0
    %v301 = vpack.c.bf16 %v300, %v300
    %v302 = vld [vmem:[#allocation5] sm:$0xf]
    %v303 = vld [vmem:[#allocation5 + $0x4] sm:$0xf]
    %v304 = vld [vmem:[#allocation5 + $0x8] sm:$0xf]
    %v305 = vld [vmem:[#allocation5 + $0xc] sm:$0xf]
    %v306 = vld [vmem:[#allocation5 + $0x10] sm:$0xf]
    %v307 = vld [vmem:[#allocation5 + $0x14] sm:$0xf]
    %v308 = vld [vmem:[#allocation5 + $0x18] sm:$0xf]
    %v309 = vld [vmem:[#allocation5 + $0x1c] sm:$0xf]
    %v310 = vld [vmem:[#allocation5 + $0x20] sm:$0xf]
    %v311 = vld [vmem:[#allocation5 + $0x24] sm:$0xf]
    %v312 = vld [vmem:[#allocation5 + $0x28] sm:$0xf]
    %v313 = vld [vmem:[#allocation5 + $0x2c] sm:$0xf]
    %v314 = vld [vmem:[#allocation5 + $0x30] sm:$0xf]
    %v315 = vld [vmem:[#allocation5 + $0x34] sm:$0xf]
    %v316 = vld [vmem:[#allocation5 + $0x38] sm:$0xf]
    %v317 = vld [vmem:[#allocation5 + $0x3c] sm:$0xf]
    %v318 = vld [vmem:[%s6] sm:$0x1]
    %v320 = vlaneseq
    %v321 = vshrl.u32 %v320, 7
    %v322 = vsub.s32 0, %v321
    %v323 = vrot.slane %v318, %v322
    %v341 = vunpack.c.l.b16 %v302
    %v342 = vunpack.c.l.b16 %v303
    %v343 = vunpack.c.l.b16 %v304
    %v344 = vunpack.c.l.b16 %v305
    %v345 = vunpack.c.l.b16 %v306
    %v346 = vunpack.c.l.b16 %v307
    %v347 = vunpack.c.l.b16 %v308
    %v348 = vunpack.c.l.b16 %v309
    %v349 = vunpack.c.l.b16 %v310
    %v350 = vunpack.c.l.b16 %v311
    %v351 = vunpack.c.l.b16 %v312
    %v352 = vunpack.c.l.b16 %v313
    %v353 = vunpack.c.l.b16 %v314
    %v354 = vunpack.c.l.b16 %v315
    %v355 = vunpack.c.l.b16 %v316
    %v356 = vunpack.c.l.b16 %v317
    %v357 = vpack.c.b16 %v342, %v341
    %v358 = vpack.c.b16 %v344, %v343
    %v359 = vpack.c.b16 %v346, %v345
    %v360 = vpack.c.b16 %v348, %v347
    %v361 = vpack.c.b16 %v350, %v349
    %v362 = vpack.c.b16 %v352, %v351
    %v363 = vpack.c.b16 %v354, %v353
    %v364 = vpack.c.b16 %v356, %v355
    %373 = vmatprep.subr.bf16.mxu0 0
    %374 = vmatpush1.bf16.msra.mxu0 %v357
    %375 = vmatprep.subr.bf16.mxu0 0
    %376 = vmatpush1.bf16.msra.mxu0 %v358
    %377 = vmatprep.subr.bf16.mxu0 0
    %378 = vmatpush1.bf16.msra.mxu0 %v359
    %379 = vmatprep.subr.bf16.mxu0 0
    %380 = vmatpush1.bf16.msra.mxu0 %v360
    %381 = vmatprep.subr.bf16.mxu0 0
    %382 = vmatpush1.bf16.msra.mxu0 %v361
    %383 = vmatprep.subr.bf16.mxu0 0
    %384 = vmatpush1.bf16.msra.mxu0 %v362
    %385 = vmatprep.subr.bf16.mxu0 0
    %386 = vmatpush1.bf16.msra.mxu0 %v363
    %387 = vmatprep.subr.bf16.mxu0 0
    %388 = vmatpush1.bf16.msra.mxu0 %v364
    %389 = vmatprep.subr.bf16.mxu0 0
    %390 = vmatpush1.bf16.msra.mxu0 0
    %391 = vmatprep.subr.bf16.mxu0 0
    %392 = vmatpush1.bf16.msra.mxu0 0
    %393 = vmatprep.subr.bf16.mxu0 0
    %394 = vmatpush1.bf16.msra.mxu0 0
    %395 = vmatprep.subr.bf16.mxu0 0
    %396 = vmatpush1.bf16.msra.mxu0 0
    %397 = vmatprep.subr.bf16.mxu0 0
    %398 = vmatpush1.bf16.msra.mxu0 0
    %399 = vmatprep.subr.bf16.mxu0 0
    %400 = vmatpush1.bf16.msra.mxu0 0
    %401 = vmatprep.subr.bf16.mxu0 0
    %402 = vmatpush1.bf16.msra.mxu0 0
    %403 = vmatprep.subr.bf16.mxu0 0
    %404 = vmatpush1.bf16.msra.mxu0 0
    %405 = vmatprep.mubr.bf16.mxu0 0
    %406 = vmatmul.mubr.bf16.gmra.mrb[0].mxu0 %v301
    %v407 = vpop.f32.mrb[0].mxu0
    %v408 = vadd.f32 %v323, %v407
    %v409 = vpop.f32.mrb[0].mxu0
    %v410 = vpop.f32.mrb[0].mxu0
    %v411 = vpop.f32.mrb[0].mxu0
    %412 = vdwg.mxu0
    %v413 = vmax.f32 %v408, 0.0
    %v414 = vpack.c.bf16 %v413, %v413
    %v415 = vld [vmem:[#allocation7] sm:$0xf]
    %v416 = vld [vmem:[#allocation7 + $0x4] sm:$0xf]
    %v417 = vld [vmem:[#allocation7 + $0x8] sm:$0xf]
    %v418 = vld [vmem:[#allocation7 + $0xc] sm:$0xf]
    %v419 = vld [vmem:[#allocation7 + $0x10] sm:$0xf]
    %v420 = vld [vmem:[#allocation7 + $0x14] sm:$0xf]
    %v421 = vld [vmem:[#allocation7 + $0x18] sm:$0xf]
    %v422 = vld [vmem:[#allocation7 + $0x1c] sm:$0xf]
    %v423 = vld [vmem:[#allocation7 + $0x20] sm:$0xf]
    %v424 = vld [vmem:[#allocation7 + $0x24] sm:$0xf]
    %v425 = vld [vmem:[#allocation7 + $0x28] sm:$0xf]
    %v426 = vld [vmem:[#allocation7 + $0x2c] sm:$0xf]
    %v427 = vld [vmem:[#allocation7 + $0x30] sm:$0xf]
    %v428 = vld [vmem:[#allocation7 + $0x34] sm:$0xf]
    %v429 = vld [vmem:[#allocation7 + $0x38] sm:$0xf]
    %v430 = vld [vmem:[#allocation7 + $0x3c] sm:$0xf]
    %v431 = vld [vmem:[%s8] sm:$0x1]
    %v433 = vlaneseq
    %v434 = vshrl.u32 %v433, 7
    %v435 = vsub.s32 0, %v434
    %v436 = vrot.slane %v431, %v435
    %v454 = vunpack.c.l.b16 %v415
    %v455 = vunpack.c.l.b16 %v416
    %v456 = vunpack.c.l.b16 %v417
    %v457 = vunpack.c.l.b16 %v418
    %v458 = vunpack.c.l.b16 %v419
    %v459 = vunpack.c.l.b16 %v420
    %v460 = vunpack.c.l.b16 %v421
    %v461 = vunpack.c.l.b16 %v422
    %v462 = vunpack.c.l.b16 %v423
    %v463 = vunpack.c.l.b16 %v424
    %v464 = vunpack.c.l.b16 %v425
    %v465 = vunpack.c.l.b16 %v426
    %v466 = vunpack.c.l.b16 %v427
    %v467 = vunpack.c.l.b16 %v428
    %v468 = vunpack.c.l.b16 %v429
    %v469 = vunpack.c.l.b16 %v430
    %v470 = vpack.c.b16 %v455, %v454
    %v471 = vpack.c.b16 %v457, %v456
    %v472 = vpack.c.b16 %v459, %v458
    %v473 = vpack.c.b16 %v461, %v460
    %v474 = vpack.c.b16 %v463, %v462
    %v475 = vpack.c.b16 %v465, %v464
    %v476 = vpack.c.b16 %v467, %v466
    %v477 = vpack.c.b16 %v469, %v468
    %486 = vmatprep.subr.bf16.mxu0 0
    %487 = vmatpush1.bf16.msra.mxu0 %v470
    %488 = vmatprep.subr.bf16.mxu0 0
    %489 = vmatpush1.bf16.msra.mxu0 %v471
    %490 = vmatprep.subr.bf16.mxu0 0
    %491 = vmatpush1.bf16.msra.mxu0 %v472
    %492 = vmatprep.subr.bf16.mxu0 0
    %493 = vmatpush1.bf16.msra.mxu0 %v473
    %494 = vmatprep.subr.bf16.mxu0 0
    %495 = vmatpush1.bf16.msra.mxu0 %v474
    %496 = vmatprep.subr.bf16.mxu0 0
    %497 = vmatpush1.bf16.msra.mxu0 %v475
    %498 = vmatprep.subr.bf16.mxu0 0
    %499 = vmatpush1.bf16.msra.mxu0 %v476
    %500 = vmatprep.subr.bf16.mxu0 0
    %501 = vmatpush1.bf16.msra.mxu0 %v477
    %502 = vmatprep.subr.bf16.mxu0 0
    %503 = vmatpush1.bf16.msra.mxu0 0
    %504 = vmatprep.subr.bf16.mxu0 0
    %505 = vmatpush1.bf16.msra.mxu0 0
    %506 = vmatprep.subr.bf16.mxu0 0
    %507 = vmatpush1.bf16.msra.mxu0 0
    %508 = vmatprep.subr.bf16.mxu0 0
    %509 = vmatpush1.bf16.msra.mxu0 0
    %510 = vmatprep.subr.bf16.mxu0 0
    %511 = vmatpush1.bf16.msra.mxu0 0
    %512 = vmatprep.subr.bf16.mxu0 0
    %513 = vmatpush1.bf16.msra.mxu0 0
    %514 = vmatprep.subr.bf16.mxu0 0
    %515 = vmatpush1.bf16.msra.mxu0 0
    %516 = vmatprep.subr.bf16.mxu0 0
    %517 = vmatpush1.bf16.msra.mxu0 0
    %518 = vmatprep.mubr.bf16.mxu0 0
    %519 = vmatmul.mubr.bf16.gmra.mrb[0].mxu0 %v414
    %v520 = vpop.f32.mrb[0].mxu0
    %v521 = vadd.f32 %v436, %v520
    %v522 = vpop.f32.mrb[0].mxu0
    %v523 = vpop.f32.mrb[0].mxu0
    %v524 = vpop.f32.mrb[0].mxu0
    %525 = vdwg.mxu0
    %526 = vst [vmem:[#allocation8] sm:$0xff] %v521
    // Predicated region
    $region50: #{nnbase_forward.1} parent=1 // pred_check
      _
    $region51: #{nnbase_forward.1} parent=1 // pred_check_branch
      %528 = sbr.rel (0) target = $region53
    $region52: #{nnbase_forward.1} parent=1 // pred_region
      %s530 = ssub.s32 128, 128
      %531 = vsyncadd [#allocation4], %s530
      %s533 = sshll.u32 [#allocation8], 4
      %s534 = int_to_ptr.vmem [resolvable:$true] %s533
      %536 = dma.vmem_to_hbm [thread:$0]  %s534, 128, %s9, [#allocation4]
    $region53: #{nnbase_forward.1} parent=1 // pred_fallthru
      _
    // Predicated region
    $region54: #{nnbase_forward.1} parent=1 // pred_check
      _
    $region55: #{nnbase_forward.1} parent=1 // pred_check_branch
      %538 = sbr.rel (0) target = $region57
    $region56: #{nnbase_forward.1} parent=1 // pred_region
      %539 = dma.done [#allocation4], 128
    $region57: #{nnbase_forward.1} parent=1 // pred_fallthru
      _
    %540 = vsyncpa [#allocation3], 1
    %541 = vsyncpa [#allocation6], 1
    %542 = vsyncpa [#allocation4], 1

</llo_original>
